<compile_context>
chip_gen: v7x
topology: tpu7x:2x2x1
jax: 0.10.0
libtpu: 0.0.40
codegen_flags: <defaults>
</compile_context>

<pallas_src>
import numpy as np
import jax
import jax.numpy as jnp
from jax.experimental import pallas as pl
from jax.experimental.pallas import tpu as pltpu

EPS = 1e-5          # PyTorch GroupNorm default eps
LANE = 128
TN_MAX = 1024       # lane-tile width (sweepable 512..2048); multiple of 128
SUBLANE_PACK = 16   # bf16 sublane packing -> pad out_ch to a multiple of this


def _mask_kernel(x_ref, w_ref, b_ref, o_ref):
    # x:  (1, fc_dim, TN)        bf16, already GroupNorm-normalized, lane = b*T + t
    # w:  (1, out_ch_pad, fc)    bf16, folded  W2 @ (gamma*W1)
    # b:  (1, out_ch_pad, 1)     f32,  folded  b2 + W2 @ (b1 + beta*W1.sum(-1))
    # o:  (1, out_ch_pad, TN)    bf16
    o_ref[0] = (jnp.dot(w_ref[0], x_ref[0], preferred_element_type=jnp.float32)
                + b_ref[0]).astype(o_ref.dtype)


def _run_group(x, wf, bf, tn):
    ns, fc_dim, l_pad = x.shape
    out_ch = wf.shape[1]
    n_tiles = l_pad // tn
    return pl.pallas_call(
        _mask_kernel,
        out_shape=jax.ShapeDtypeStruct((ns, out_ch, l_pad), jnp.bfloat16),
        grid_spec=pltpu.PrefetchScalarGridSpec(
            num_scalar_prefetch=0,
            grid=(ns, n_tiles),   # subband outer -> weight block stays resident
            in_specs=[
                pl.BlockSpec((1, fc_dim, tn), lambda c, j: (c, 0, j)),      # x
                pl.BlockSpec((1, out_ch, fc_dim), lambda c, j: (c, 0, 0)),  # Wf
                pl.BlockSpec((1, out_ch, 1), lambda c, j: (c, 0, 0)),       # bf
            ],
            out_specs=pl.BlockSpec((1, out_ch, tn), lambda c, j: (c, 0, j)),
        ),
        compiler_params=pltpu.CompilerParams(
            dimension_semantics=("parallel", "parallel"),
            vmem_limit_bytes=48 * 1024 * 1024),
    )(x, wf, bf)


class MaskEstimationModulePallas:
    def __init__(self, sr, fc_dim, bands, num_subbands, key):
        self.fs = int(sr / 2)
        self.fc_dim = fc_dim
        assert len(bands) + 1 == len(num_subbands)
        self.bands = [0] + list(bands) + [self.fs]
        self.num_subbands = list(num_subbands)
        self.num_subbands_cum = np.cumsum([0] + self.num_subbands)
        self.bands_ranges = [self.bands[i + 1] - self.bands[i]
                             for i in range(len(num_subbands))]
        self.hidden = 4 * fc_dim

        self.params = []       # unfolded f32 params (used by the pure-JAX reference)
        band_folded = []       # per-band (Wf, bf) collapsed conv weights
        self.band_info = []
        for i, ns in enumerate(self.num_subbands):
            rng = self.bands_ranges[i]
            assert (2 * rng) % ns == 0
            out_ch = (2 * rng) // ns            # conv2 out channels per subband
            assert out_ch % 2 == 0
            key, k1, k2, k3, k4, k5, k6 = jax.random.split(key, 7)
            gamma = 1.0 + 0.1 * jax.random.normal(k1, (ns,), jnp.float32)
            beta = 0.1 * jax.random.normal(k2, (ns,), jnp.float32)
            w1 = 0.1 * jax.random.normal(k3, (ns, self.hidden, fc_dim), jnp.float32)
            b1 = 0.1 * jax.random.normal(k4, (ns, self.hidden), jnp.float32)
            w2 = 0.1 * jax.random.normal(k5, (ns, out_ch, self.hidden), jnp.float32)
            b2 = 0.1 * jax.random.normal(k6, (ns, out_ch), jnp.float32)
            self.params.append((gamma, beta, w1, b1, w2, b2))

            # Fold GroupNorm affine into conv1, then collapse conv1∘conv2
            # (exact: the reference Sequential has no activation between them).
            w1p = w1 * gamma[:, None, None]                         # (ns, hidden, fc)
            b1p = b1 + beta[:, None] * w1.sum(axis=-1)              # (ns, hidden)
            wf = jnp.einsum('cjh,chf->cjf', w2, w1p)                # (ns, out_ch, fc)
            bf = b2 + jnp.einsum('cjh,ch->cj', w2, b1p)             # (ns, out_ch)
            band_folded.append((wf, bf))
            self.band_info.append(dict(
                ns=ns, out_ch=out_ch, rng=rng,
                s=int(self.num_subbands_cum[i]),
                e=int(self.num_subbands_cum[i + 1])))

        # Merge bands with identical out_ch into a single pallas_call.
        group_of = {}
        self.groups = []
        for i, info in enumerate(self.band_info):
            oc = info['out_ch']
            if oc not in group_of:
                group_of[oc] = len(self.groups)
                self.groups.append(dict(out_ch=oc, band_idx=[]))
            self.groups[group_of[oc]]['band_idx'].append(i)

        group_params = []
        for g in self.groups:
            oc = g['out_ch']
            oc_pad = ((oc + SUBLANE_PACK - 1) // SUBLANE_PACK) * SUBLANE_PACK
            g['out_ch_pad'] = oc_pad
            wf = jnp.concatenate([band_folded[i][0] for i in g['band_idx']], axis=0)
            bf = jnp.concatenate([band_folded[i][1] for i in g['band_idx']], axis=0)
            if oc_pad != oc:     # zero-padded rows -> zero outputs, sliced off later
                wf = jnp.pad(wf, ((0, 0), (0, oc_pad - oc), (0, 0)))
                bf = jnp.pad(bf, ((0, 0), (0, oc_pad - oc)))
            group_params.append((wf.astype(jnp.bfloat16),
                                 bf[:, :, None].astype(jnp.float32)))
        self._group_params = tuple(group_params)
        self._forward = jax.jit(self._forward_impl)

    # -------- jitted forward: all XLA glue fused around the pallas_calls --------
    def _forward_impl(self, q, group_params):
        # q: (B, fc_dim, N_total_subbands, T) f32
        B, fc_dim, _, T = q.shape
        L = B * T
        tn = min(TN_MAX, ((L + LANE - 1) // LANE) * LANE)   # lane tile, mult of 128
        n_tiles = -(-L // tn)
        l_pad = n_tiles * tn

        band_out = [None] * len(self.band_info)
        for g, (wf, bf) in zip(self.groups, group_params):
            xs = []
            for i in g['band_idx']:
                info = self.band_info[i]
                ns, s, e = info['ns'], info['s'], info['e']
                qs = q[:, :, s:e, :]                               # (B, fc, ns, T)
                # GroupNorm(ns, ns): per (batch, subband) stats over (fc, T), f32.
                mean = qs.mean(axis=(1, 3))                        # (B, ns)
                rstd = jax.lax.rsqrt(qs.var(axis=(1, 3)) + EPS)    # biased variance
                xb = jnp.transpose(qs, (2, 1, 0, 3))               # (ns, fc, B, T)
                xn = (xb - mean.T[:, None, :, None]) * rstd.T[:, None, :, None]
                xs.append(xn.astype(jnp.bfloat16).reshape(ns, fc_dim, L))
            x = xs[0] if len(xs) == 1 else jnp.concatenate(xs, axis=0)
            if l_pad != L:
                x = jnp.pad(x, ((0, 0), (0, 0), (0, l_pad - L)))

            o = _run_group(x, wf, bf, tn)          # (NS_group, out_ch_pad, l_pad) bf16

            off = 0
            for i in g['band_idx']:
                info = self.band_info[i]
                ns, oc, rng = info['ns'], info['out_ch'], info['rng']
                band_out[i] = o[off:off + ns, :oc, :L].reshape(2 * rng, B, T)
                off += ns

        # Single final Rearrange('b (ns_bw c) 1 t -> b ns_bw t c', c=2) + concat.
        full = jnp.concatenate(band_out, axis=0)                   # (2*fs, B, T)
        mask = full.reshape(self.fs, 2, B, T).transpose(2, 0, 3, 1)  # (B, fs, T, 2)
        return mask.astype(jnp.float32)

    def __call__(self, q):
        return self._forward(q, self._group_params)

    # -------- pure-JAX f32 reference (two grouped convs, explicit affine) --------
    def reference(self, q):
        B, _, _, T = q.shape
        outs = []
        for i, ns in enumerate(self.num_subbands):
            gamma, beta, w1, b1, w2, b2 = self.params[i]
            s, e = int(self.num_subbands_cum[i]), int(self.num_subbands_cum[i + 1])
            x = jnp.transpose(q[:, :, s:e, :], (0, 2, 1, 3))  # (B, ns, fc, T)
            mean = x.mean(axis=(2, 3), keepdims=True)
            var = ((x - mean) ** 2).mean(axis=(2, 3), keepdims=True)
            xn = (x - mean) / jnp.sqrt(var + EPS)
            xn = xn * gamma[None, :, None, None] + beta[None, :, None, None]
            h = jnp.einsum('bcft,chf->bcht', xn, w1) + b1[None, :, :, None]
            o = jnp.einsum('bcht,cjh->bcjt', h, w2) + b2[None, :, :, None]
            out_ch = o.shape[2]
            half = out_ch // 2
            o = (o.reshape(B, ns, half, 2, T)
                   .transpose(0, 1, 2, 4, 3)
                   .reshape(B, ns * half, T, 2))
            outs.append(o)
        return jnp.concatenate(outs, axis=1)


if __name__ == "__main__":
    # Small synthetic config with the same structural constraints as the real
    # module (band ranges split evenly by their subband counts).
    sr = 64                      # -> fs = 32
    fc_dim = 8                   # -> hidden = 32
    bands = [8, 16]
    num_subbands = [2, 2, 1]     # N_total = 5, ranges = [8, 8, 16]
    B, T = 2, 8

    key = jax.random.PRNGKey(0)
    key, kq, kp = jax.random.split(key, 3)

    module = MaskEstimationModulePallas(sr, fc_dim, bands, num_subbands, kp)

    n_total = sum(num_subbands)
    q = jax.random.normal(kq, (B, fc_dim, n_total, T), jnp.float32)

    mask = module(q)
    mask = jax.block_until_ready(mask)

    expected_shape = (B, int(sr / 2), T, 2)
    assert mask.shape == expected_shape, (mask.shape, expected_shape)

    ref = jax.block_until_ready(module.reference(q))
    # bf16 matmul operands + bf16 kernel output (f32 accumulation) -> loosened tol
    assert np.allclose(np.asarray(mask), np.asarray(ref), atol=3e-2, rtol=3e-2), \
        np.max(np.abs(np.asarray(mask) - np.asarray(ref)))

    print("KERNEL_OK")
</pallas_src>

<mosaic_0001>
module attributes {stable_mosaic.version = 11 : i64} {
  func.func @_mask_kernel(%arg0: i32, %arg1: i32, %arg2: memref<1x8x128xbf16, #tpu.memory_space<vmem>>, %arg3: memref<1x16x8xbf16, #tpu.memory_space<vmem>>, %arg4: memref<1x16x1xf32, #tpu.memory_space<vmem>>, %arg5: memref<1x16x128xbf16, #tpu.memory_space<vmem>>) attributes {dimension_semantics = [#tpu.dimension_semantics<parallel>, #tpu.dimension_semantics<parallel>], iteration_bounds = array<i64: 4, 1>, scalar_prefetch = 0 : i64, scratch_operands = 0 : i64, tpu.core_type = #tpu.core_type<tc>, window_params = [{transform_indices = @transform_0, window_bounds = array<i64: 1, 8, 128>}, {transform_indices = @transform_1, window_bounds = array<i64: 1, 16, 8>}, {transform_indices = @transform_2, window_bounds = array<i64: 1, 16, 1>}, {transform_indices = @transform_3, window_bounds = array<i64: 1, 16, 128>}]} {
    %c0 = arith.constant 0 : index
    %c0_0 = arith.constant 0 : index
    %c0_1 = arith.constant 0 : index
    %0 = vector.load %arg3[%c0, %c0_0, %c0_1] : memref<1x16x8xbf16, #tpu.memory_space<vmem>>, vector<1x16x8xbf16>
    %1 = vector.shape_cast %0 : vector<1x16x8xbf16> to vector<16x8xbf16>
    %c0_2 = arith.constant 0 : index
    %c0_3 = arith.constant 0 : index
    %c0_4 = arith.constant 0 : index
    %2 = vector.load %arg2[%c0_2, %c0_3, %c0_4] : memref<1x8x128xbf16, #tpu.memory_space<vmem>>, vector<1x8x128xbf16>
    %3 = vector.shape_cast %2 : vector<1x8x128xbf16> to vector<8x128xbf16>
    %cst = arith.constant dense<0.000000e+00> : vector<16x128xf32>
    %4 = tpu.matmul %1, %3, %cst {dimension_numbers = #tpu.dot_dimension_numbers<[1], [0], [0], [1], [0, 0, 1, 1], [], []>} : vector<16x8xbf16>, vector<8x128xbf16>, vector<16x128xf32> -> vector<16x128xf32>
    %c0_5 = arith.constant 0 : index
    %c0_6 = arith.constant 0 : index
    %c0_7 = arith.constant 0 : index
    %5 = vector.load %arg4[%c0_5, %c0_6, %c0_7] : memref<1x16x1xf32, #tpu.memory_space<vmem>>, vector<1x16x1xf32>
    %6 = vector.shape_cast %5 : vector<1x16x1xf32> to vector<16x1xf32>
    %7 = vector.broadcast %6 : vector<16x1xf32> to vector<16x128xf32>
    %8 = arith.addf %4, %7 : vector<16x128xf32>
    %9 = arith.truncf %8 : vector<16x128xf32> to vector<16x128xbf16>
    %c0_8 = arith.constant 0 : index
    %c0_9 = arith.constant 0 : index
    %c0_10 = arith.constant 0 : index
    %10 = vector.load %arg5[%c0_8, %c0_9, %c0_10] : memref<1x16x128xbf16, #tpu.memory_space<vmem>>, vector<1x16x128xbf16>
    %11 = vector.shape_cast %10 : vector<1x16x128xbf16> to vector<16x128xbf16>
    %12 = vector.shape_cast %9 : vector<16x128xbf16> to vector<1x16x128xbf16>
    tpu.vector_store %arg5[%c0_8, %c0_9, %c0_10], %12 {strides = array<i32>} : memref<1x16x128xbf16, #tpu.memory_space<vmem>>, vector<1x16x128xbf16>,
    return
  }
  func.func @transform_0(%arg0: i32, %arg1: i32) -> (i32, i32, i32) {
    %c0_i32 = arith.constant 0 : i32
    %c0_i32_0 = arith.constant 0 : i32
    return %arg0, %c0_i32, %arg1 : i32, i32, i32
  }
  func.func @transform_1(%arg0: i32, %arg1: i32) -> (i32, i32, i32) {
    %c0_i32 = arith.constant 0 : i32
    %c0_i32_0 = arith.constant 0 : i32
    %c0_i32_1 = arith.constant 0 : i32
    return %arg0, %c0_i32, %c0_i32_0 : i32, i32, i32
  }
  func.func @transform_2(%arg0: i32, %arg1: i32) -> (i32, i32, i32) {
    %c0_i32 = arith.constant 0 : i32
    %c0_i32_0 = arith.constant 0 : i32
    %c0_i32_1 = arith.constant 0 : i32
    return %arg0, %c0_i32, %c0_i32_0 : i32, i32, i32
  }
  func.func @transform_3(%arg0: i32, %arg1: i32) -> (i32, i32, i32) {
    %c0_i32 = arith.constant 0 : i32
    %c0_i32_0 = arith.constant 0 : i32
    return %arg0, %c0_i32, %arg1 : i32, i32, i32
  }
}

module attributes {stable_mosaic.version = 11 : i64} {
  func.func @_mask_kernel(%arg0: i32, %arg1: i32, %arg2: memref<1x8x128xbf16, #tpu.memory_space<vmem>>, %arg3: memref<1x32x8xbf16, #tpu.memory_space<vmem>>, %arg4: memref<1x32x1xf32, #tpu.memory_space<vmem>>, %arg5: memref<1x32x128xbf16, #tpu.memory_space<vmem>>) attributes {dimension_semantics = [#tpu.dimension_semantics<parallel>, #tpu.dimension_semantics<parallel>], iteration_bounds = array<i64: 1, 1>, scalar_prefetch = 0 : i64, scratch_operands = 0 : i64, tpu.core_type = #tpu.core_type<tc>, window_params = [{transform_indices = @transform_0, window_bounds = array<i64: 1, 8, 128>}, {transform_indices = @transform_1, window_bounds = array<i64: 1, 32, 8>}, {transform_indices = @transform_2, window_bounds = array<i64: 1, 32, 1>}, {transform_indices = @transform_3, window_bounds = array<i64: 1, 32, 128>}]} {
    %c0 = arith.constant 0 : index
    %c0_0 = arith.constant 0 : index
    %c0_1 = arith.constant 0 : index
    %0 = vector.load %arg3[%c0, %c0_0, %c0_1] : memref<1x32x8xbf16, #tpu.memory_space<vmem>>, vector<1x32x8xbf16>
    %1 = vector.shape_cast %0 : vector<1x32x8xbf16> to vector<32x8xbf16>
    %c0_2 = arith.constant 0 : index
    %c0_3 = arith.constant 0 : index
    %c0_4 = arith.constant 0 : index
    %2 = vector.load %arg2[%c0_2, %c0_3, %c0_4] : memref<1x8x128xbf16, #tpu.memory_space<vmem>>, vector<1x8x128xbf16>
    %3 = vector.shape_cast %2 : vector<1x8x128xbf16> to vector<8x128xbf16>
    %cst = arith.constant dense<0.000000e+00> : vector<32x128xf32>
    %4 = tpu.matmul %1, %3, %cst {dimension_numbers = #tpu.dot_dimension_numbers<[1], [0], [0], [1], [0, 0, 1, 1], [], []>} : vector<32x8xbf16>, vector<8x128xbf16>, vector<32x128xf32> -> vector<32x128xf32>
    %c0_5 = arith.constant 0 : index
    %c0_6 = arith.constant 0 : index
    %c0_7 = arith.constant 0 : index
    %5 = vector.load %arg4[%c0_5, %c0_6, %c0_7] : memref<1x32x1xf32, #tpu.memory_space<vmem>>, vector<1x32x1xf32>
    %6 = vector.shape_cast %5 : vector<1x32x1xf32> to vector<32x1xf32>
    %7 = vector.broadcast %6 : vector<32x1xf32> to vector<32x128xf32>
    %8 = arith.addf %4, %7 : vector<32x128xf32>
    %9 = arith.truncf %8 : vector<32x128xf32> to vector<32x128xbf16>
    %c0_8 = arith.constant 0 : index
    %c0_9 = arith.constant 0 : index
    %c0_10 = arith.constant 0 : index
    %10 = vector.load %arg5[%c0_8, %c0_9, %c0_10] : memref<1x32x128xbf16, #tpu.memory_space<vmem>>, vector<1x32x128xbf16>
    %11 = vector.shape_cast %10 : vector<1x32x128xbf16> to vector<32x128xbf16>
    %12 = vector.shape_cast %9 : vector<32x128xbf16> to vector<1x32x128xbf16>
    tpu.vector_store %arg5[%c0_8, %c0_9, %c0_10], %12 {strides = array<i32>} : memref<1x32x128xbf16, #tpu.memory_space<vmem>>, vector<1x32x128xbf16>,
    return
  }
  func.func @transform_0(%arg0: i32, %arg1: i32) -> (i32, i32, i32) {
    %c0_i32 = arith.constant 0 : i32
    %c0_i32_0 = arith.constant 0 : i32
    return %arg0, %c0_i32, %arg1 : i32, i32, i32
  }
  func.func @transform_1(%arg0: i32, %arg1: i32) -> (i32, i32, i32) {
    %c0_i32 = arith.constant 0 : i32
    %c0_i32_0 = arith.constant 0 : i32
    %c0_i32_1 = arith.constant 0 : i32
    return %arg0, %c0_i32, %c0_i32_0 : i32, i32, i32
  }
  func.func @transform_2(%arg0: i32, %arg1: i32) -> (i32, i32, i32) {
    %c0_i32 = arith.constant 0 : i32
    %c0_i32_0 = arith.constant 0 : i32
    %c0_i32_1 = arith.constant 0 : i32
    return %arg0, %c0_i32, %c0_i32_0 : i32, i32, i32
  }
  func.func @transform_3(%arg0: i32, %arg1: i32) -> (i32, i32, i32) {
    %c0_i32 = arith.constant 0 : i32
    %c0_i32_0 = arith.constant 0 : i32
    return %arg0, %c0_i32, %arg1 : i32, i32, i32
  }
}

</mosaic_0001>

<llo_original>
// kernel: _forward_impl.2
$region0: #{_forward_impl.2}
  #allocation0 [shape = 'u32[]', space=smem, size = 0x4, offset = 0x4, fixed_abs, tag = 'smem constant byte address 0x4 - core index']
  #allocation1 [shape = 'u32[144,128]{1,0:T(1,128)}', space=vmem, size = 0x12000, scoped, tag = 'internal scratch']
  %s0 = inlined_call_operand.vmem [shape: bf16[4,8,128], index: 0, kind: input, shape index: {}]
  %s1 = inlined_call_operand.vmem [shape: bf16[4,16,8], index: 1, kind: input, shape index: {}]
  %s2 = inlined_call_operand.vmem [shape: f32[4,16,1], index: 2, kind: input, shape index: {}]
  %s3 = inlined_call_operand.vmem [shape: bf16[4,16,128], index: 3, kind: output, shape index: {}]
  %s4 = sld [smem:[#allocation0]]
  $region45: #{_forward_impl.2} parent=0
    _
  %s6 = ssub.s32 1, %s4
  %s7 = scalar_select 0, %s6, %s4
  loop: start=0, step=1, limit=6
  $region2: #{_forward_impl.2} parent=0 // loop_pre_header
    _
  $region3: #{_forward_impl.2} parent=0 // loop_header
    %s9 = sphi 0, %s13
    %p10 = scmp.ge.s32.totalorder %s9, 6
    %s16 = sphi 0, %s28
    %s17 = sphi 0, %s24
    %s18 = sphi 0, %s16
    %s19 = sphi 0, %s17
    %s20 = sphi 0, %s18
    %s21 = sphi 0, %s19
    %s33 = sphi 0, %s35
    %s36 = sphi 0, %s33
    %s37 = sphi 0, %s36
    %s53 = sphi 0, %s37
    %s59 = sphi 0, %s61
    %s62 = sphi 0, %s59
    %s63 = sphi 0, %s62
    %s79 = sphi 0, %s63
    %s85 = sphi 0, %s87
    %s88 = sphi 0, %s85
    %s89 = sphi 0, %s88
    %s105 = sphi 0, %s89
    %s113 = sphi 0, %s115
    %s116 = sphi 0, %s113
    %s117 = sphi 0, %s116
    %s133 = sphi 0, %s117
  $region4: #{_forward_impl.2} parent=0 // loop_header_branch
    %12 = sbr.rel (%p10) target = $region8
  $region5: #{_forward_impl.2} parent=0 // loop_body
    %s14 = ssub.s32 %s9, 1
    %s15 = ssub.s32 %s9, 2
    %s22 = sadd.s32 1, %s17
    %p23 = scmp.ge.s32.totalorder %s22, 1
    %s24 = scalar_select %p23, 0, %s22
    %s25 = sadd.s32 1, %s16
    %s26 = scalar_select %p23, %s25, %s16
    %p27 = scmp.ge.s32.totalorder %s26, 4
    %s28 = scalar_select %p27, 0, %s26
    %s29 = ssub.s32 %s16, %s28
    %s30 = ssub.s32 %s17, %s24
    %s31 = sor.u32 %s29, %s30
    %p32 = scmp.eq.s32.totalorder %s31, 0
    %s34 = sadd.s32 %s33, 1
    %s35 = scalar_select %p32, %s33, %s34
    %p38 = pneg %p32
    %p39 = scmp.eq.s32.totalorder %s9, 3
    %p40 = por %p38, %p39
    %p41 = scmp.ne.s32.totalorder %s33, %s36
    %p42 = scmp.eq.s32.totalorder %s9, 0
    %p43 = por %p41, %p42
    %p44 = scmp.ne.s32.totalorder %s33, %s36
    %p45 = scmp.eq.s32.totalorder %s14, 3
    %p46 = por %p44, %p45
    %p47 = scmp.ne.s32.totalorder %s36, %s37
    %p48 = scmp.eq.s32.totalorder %s14, 0
    %p49 = por %p47, %p48
    %p50 = scmp.ne.s32.totalorder %s36, %s37
    %p51 = scmp.eq.s32.totalorder %s15, 3
    %p52 = por %p50, %p51
    %p54 = scmp.ne.s32.totalorder %s37, %s53
    %p55 = scmp.eq.s32.totalorder %s15, 0
    %p56 = por %p54, %p55
    %s57 = ssub.s32 %s16, %s28
    %p58 = scmp.eq.s32.totalorder %s57, 0
    %s60 = sadd.s32 %s59, 1
    %s61 = scalar_select %p58, %s59, %s60
    %p64 = pneg %p58
    %p65 = scmp.eq.s32.totalorder %s9, 3
    %p66 = por %p64, %p65
    %p67 = scmp.ne.s32.totalorder %s59, %s62
    %p68 = scmp.eq.s32.totalorder %s9, 0
    %p69 = por %p67, %p68
    %p70 = scmp.ne.s32.totalorder %s59, %s62
    %p71 = scmp.eq.s32.totalorder %s14, 3
    %p72 = por %p70, %p71
    %p73 = scmp.ne.s32.totalorder %s62, %s63
    %p74 = scmp.eq.s32.totalorder %s14, 0
    %p75 = por %p73, %p74
    %p76 = scmp.ne.s32.totalorder %s62, %s63
    %p77 = scmp.eq.s32.totalorder %s15, 3
    %p78 = por %p76, %p77
    %p80 = scmp.ne.s32.totalorder %s63, %s79
    %p81 = scmp.eq.s32.totalorder %s15, 0
    %p82 = por %p80, %p81
    %s83 = ssub.s32 %s16, %s28
    %p84 = scmp.eq.s32.totalorder %s83, 0
    %s86 = sadd.s32 %s85, 1
    %s87 = scalar_select %p84, %s85, %s86
    %p90 = pneg %p84
    %p91 = scmp.eq.s32.totalorder %s9, 3
    %p92 = por %p90, %p91
    %p93 = scmp.ne.s32.totalorder %s85, %s88
    %p94 = scmp.eq.s32.totalorder %s9, 0
    %p95 = por %p93, %p94
    %p96 = scmp.ne.s32.totalorder %s85, %s88
    %p97 = scmp.eq.s32.totalorder %s14, 3
    %p98 = por %p96, %p97
    %p99 = scmp.ne.s32.totalorder %s88, %s89
    %p100 = scmp.eq.s32.totalorder %s14, 0
    %p101 = por %p99, %p100
    %p102 = scmp.ne.s32.totalorder %s88, %s89
    %p103 = scmp.eq.s32.totalorder %s15, 3
    %p104 = por %p102, %p103
    %p106 = scmp.ne.s32.totalorder %s89, %s105
    %p107 = scmp.eq.s32.totalorder %s15, 0
    %p108 = por %p106, %p107
    %s109 = ssub.s32 %s16, %s28
    %s110 = ssub.s32 %s17, %s24
    %s111 = sor.u32 %s109, %s110
    %p112 = scmp.eq.s32.totalorder %s111, 0
    %s114 = sadd.s32 %s113, 1
    %s115 = scalar_select %p112, %s113, %s114
    %p118 = pneg %p112
    %p119 = scmp.eq.s32.totalorder %s9, 3
    %p120 = por %p118, %p119
    %p121 = scmp.ne.s32.totalorder %s113, %s116
    %p122 = scmp.eq.s32.totalorder %s9, 0
    %p123 = por %p121, %p122
    %p124 = scmp.ne.s32.totalorder %s113, %s116
    %p125 = scmp.eq.s32.totalorder %s14, 3
    %p126 = por %p124, %p125
    %p127 = scmp.ne.s32.totalorder %s116, %s117
    %p128 = scmp.eq.s32.totalorder %s14, 0
    %p129 = por %p127, %p128
    %p130 = scmp.ne.s32.totalorder %s116, %s117
    %p131 = scmp.eq.s32.totalorder %s15, 3
    %p132 = por %p130, %p131
    %p134 = scmp.ne.s32.totalorder %s117, %s133
    %p135 = scmp.eq.s32.totalorder %s15, 0
    %p136 = por %p134, %p135
    %p137 = scmp.le.s32.totalorder 1, %s9
    %p138 = scmp.lt.s32.totalorder %s9, 5
    %p139 = pnand %p137, %p138
    %p140 = pneg %p139
    // Predicated region
    $region9: #{_forward_impl.2} parent=5 // pred_check
      _
    $region10: #{_forward_impl.2} parent=5 // pred_check_branch
      %142 = sbr.rel (%p139) target = $region12
    $region11: #{_forward_impl.2} parent=5 // pred_region
      %s143 = ssub.s32 %s9, 1
    $region12: #{_forward_impl.2} parent=5 // pred_fallthru
      _
    %p144 = scmp.lt.s32.totalorder %s9, 4
    // Predicated region
    $region13: #{_forward_impl.2} parent=5 // pred_check
      %p145 = pneg %p144
    $region14: #{_forward_impl.2} parent=5 // pred_check_branch
      %147 = sbr.rel (%p145) target = $region16
    $region15: #{_forward_impl.2} parent=5 // pred_region
      // Predicated region
      $region17: #{_forward_impl.2} parent=15 // pred_check
        %p148 = pneg %p43
      $region18: #{_forward_impl.2} parent=15 // pred_check_branch
        %150 = sbr.rel (%p148) target = $region20
      $region19: #{_forward_impl.2} parent=15 // pred_region
        %p151 = scmp.lt.s32.totalorder %s16, 3
        %s152 = scalar_select %p151, %s16, 3
        %p153 = scmp.lt.s32.totalorder %s17, 0
        %s154 = scalar_select %p153, %s17, 0
        %s155 = sadd.s32 %s154, %s152
        %s156 = smul.addr %s155, 4
        %s157 = scalar_lea.vmem %s0, %s156
      $region20: #{_forward_impl.2} parent=15 // pred_fallthru
        _
      // Predicated region
      $region21: #{_forward_impl.2} parent=15 // pred_check
        %p158 = pneg %p69
      $region22: #{_forward_impl.2} parent=15 // pred_check_branch
        %160 = sbr.rel (%p158) target = $region24
      $region23: #{_forward_impl.2} parent=15 // pred_region
        %p161 = scmp.lt.s32.totalorder %s16, 3
        %s162 = scalar_select %p161, %s16, 3
        %s163 = smul.addr %s162, 2
        %s164 = smul.addr %s163, 4
        %s165 = scalar_lea.vmem %s1, %s164
      $region24: #{_forward_impl.2} parent=15 // pred_fallthru
        _
      // Predicated region
      $region25: #{_forward_impl.2} parent=15 // pred_check
        %p166 = pneg %p95
      $region26: #{_forward_impl.2} parent=15 // pred_check_branch
        %168 = sbr.rel (%p166) target = $region28
      $region27: #{_forward_impl.2} parent=15 // pred_region
        %p169 = scmp.lt.s32.totalorder %s16, 3
        %s170 = scalar_select %p169, %s16, 3
        %s171 = smul.addr %s170, 2
        %s172 = smul.addr %s171, 8
        %s173 = scalar_lea.vmem %s2, %s172
      $region28: #{_forward_impl.2} parent=15 // pred_fallthru
        _
    $region16: #{_forward_impl.2} parent=5 // pred_fallthru
      _
    %p174 = scmp.le.s32.totalorder 1, %s9
    %p175 = scmp.lt.s32.totalorder %s9, 5
    %p176 = pnand %p174, %p175
    %p177 = pneg %p176
    // Predicated region
    $region29: #{_forward_impl.2} parent=5 // pred_check
      _
    $region30: #{_forward_impl.2} parent=5 // pred_check_branch
      %179 = sbr.rel (%p176) target = $region32
    $region31: #{_forward_impl.2} parent=5 // pred_region
      %s180 = ssub.s32 %s9, 1
      %p181 = scmp.lt.s32.totalorder %s18, 3
      %s182 = scalar_select %p181, %s18, 3
      %p183 = scmp.lt.s32.totalorder %s19, 0
      %s184 = scalar_select %p183, %s19, 0
      %s185 = sadd.s32 %s184, %s182
      %s186 = smul.addr %s185, 4
      %s187 = scalar_lea.vmem %s0, %s186
      %p188 = pneg %p49
      %p189 = pneg %p46
      %p190 = scmp.lt.s32.totalorder %s18, 3
      %s191 = scalar_select %p190, %s18, 3
      %s192 = smul.addr %s191, 2
      %s193 = smul.addr %s192, 4
      %s194 = scalar_lea.vmem %s1, %s193
      %p195 = pneg %p75
      %p196 = pneg %p72
      %p197 = scmp.lt.s32.totalorder %s18, 3
      %s198 = scalar_select %p197, %s18, 3
      %s199 = smul.addr %s198, 2
      %s200 = smul.addr %s199, 8
      %s201 = scalar_lea.vmem %s2, %s200
      %p202 = pneg %p101
      %p203 = pneg %p98
      %p204 = pneg %p129
      %p205 = pneg %p126
      %p206 = scmp.lt.s32.totalorder %s18, 3
      %s207 = scalar_select %p206, %s18, 3
      %p208 = scmp.lt.s32.totalorder %s19, 0
      %s209 = scalar_select %p208, %s19, 0
      %s210 = smul.addr %s207, 2
      %s211 = sadd.s32 %s209, %s210
      %s212 = smul.addr %s211, 4
      %s213 = scalar_lea.vmem %s3, %s212
      %p214 = scmp.lt.s32.totalorder %s18, 3
      %s215 = scalar_select %p214, %s18, 3
      %p216 = scmp.lt.s32.totalorder %s19, 0
      %s217 = scalar_select %p216, %s19, 0
      %s218 = sadd.s32 %s217, %s215
      %s219 = smul.addr %s218, 4
      %s220 = scalar_lea.vmem %s0, %s219
      %p221 = scmp.lt.s32.totalorder %s18, 3
      %s222 = scalar_select %p221, %s18, 3
      %s223 = smul.addr %s222, 2
      %s224 = smul.addr %s223, 4
      %s225 = scalar_lea.vmem %s1, %s224
      %p226 = scmp.lt.s32.totalorder %s18, 3
      %s227 = scalar_select %p226, %s18, 3
      %s228 = smul.addr %s227, 2
      %s229 = smul.addr %s228, 8
      %s230 = scalar_lea.vmem %s2, %s229
      %p231 = scmp.lt.s32.totalorder %s18, 3
      %s232 = scalar_select %p231, %s18, 3
      %p233 = scmp.lt.s32.totalorder %s19, 0
      %s234 = scalar_select %p233, %s19, 0
      %s235 = smul.addr %s232, 2
      %s236 = sadd.s32 %s234, %s235
      %s237 = smul.addr %s236, 4
      %s238 = scalar_lea.vmem %s3, %s237
      %v240 = vld [vmem:[%s225] sm:$0xf]
      %v241 = vld [vmem:[%s225 + $0x4] sm:$0xf]
      %v242 = vld [vmem:[%s220] sm:$0xf]
      %v243 = vld [vmem:[%s230] sm:$0xff]
      %v244 = vld [vmem:[%s230 + $0x8] sm:$0xff]
      %246 = vset.pattern.permute.xlu0 0
      %247 = vperm.xlu0 %246, %v243
      %v248 = vpop.permute.xlu0 %247
      %251 = vset.pattern.permute.xlu0 0
      %252 = vperm.xlu0 %251, %v244
      %v253 = vpop.permute.xlu0 %252
      %v257 = vunpack.c.l.b16 %v240
      %v258 = vunpack.c.l.b16 %v241
      %v259 = vpack.c.b16 %v258, %v257
      %vm260 = vcmask 64512
      %v262 = vsel %vm260, %v259, 0
      %vm264 = vcmask 1043456
      %v266 = vsel %vm264, %v242, 0
      %268 = vmatprep.subr.bf16.mxu0 0
      %269 = vmatpush1.bf16.msra.mxu0 %v266
      %270 = vmatprep.subr.bf16.mxu0 0
      %271 = vmatpush1.bf16.msra.mxu0 0
      %272 = vmatprep.subr.bf16.mxu0 0
      %273 = vmatpush1.bf16.msra.mxu0 0
      %274 = vmatprep.subr.bf16.mxu0 0
      %275 = vmatpush1.bf16.msra.mxu0 0
      %276 = vmatprep.subr.bf16.mxu0 0
      %277 = vmatpush1.bf16.msra.mxu0 0
      %278 = vmatprep.subr.bf16.mxu0 0
      %279 = vmatpush1.bf16.msra.mxu0 0
      %280 = vmatprep.subr.bf16.mxu0 0
      %281 = vmatpush1.bf16.msra.mxu0 0
      %282 = vmatprep.subr.bf16.mxu0 0
      %283 = vmatpush1.bf16.msra.mxu0 0
      %284 = vmatprep.subr.bf16.mxu0 0
      %285 = vmatpush1.bf16.msra.mxu0 0
      %286 = vmatprep.subr.bf16.mxu0 0
      %287 = vmatpush1.bf16.msra.mxu0 0
      %288 = vmatprep.subr.bf16.mxu0 0
      %289 = vmatpush1.bf16.msra.mxu0 0
      %290 = vmatprep.subr.bf16.mxu0 0
      %291 = vmatpush1.bf16.msra.mxu0 0
      %292 = vmatprep.subr.bf16.mxu0 0
      %293 = vmatpush1.bf16.msra.mxu0 0
      %294 = vmatprep.subr.bf16.mxu0 0
      %295 = vmatpush1.bf16.msra.mxu0 0
      %296 = vmatprep.subr.bf16.mxu0 0
      %297 = vmatpush1.bf16.msra.mxu0 0
      %298 = vmatprep.subr.bf16.mxu0 0
      %299 = vmatpush1.bf16.msra.mxu0 0
      %300 = vmatprep.mubr.bf16.mxu0 0
      %301 = vmatmul.mubr.bf16.gmra.mrb[0].mxu0 %v262
      %v302 = vpop.f32.mrb[0].mxu0
      %v303 = vadd.f32 %v248, %v302
      %v304 = vpop.f32.mrb[0].mxu0
      %v305 = vpop.f32.mrb[0].mxu0
      %v306 = vadd.f32 %v253, %v305
      %v307 = vpop.f32.mrb[0].mxu0
      %308 = vdwg.mxu0
      %v309 = vpack.c.bf16 %v306, %v303
      %v311 = vunpack.c.l.b16 %v309
      %v312 = vunpack.c.h.b16 %v309
      %v313 = vpack.c.b16 %v311, %v311
      %v314 = vpack.c.b16 %v312, %v312
      %317 = vst [vmem:[%s238] sm:$0xf] %v313
      %318 = vst [vmem:[%s238 + $0x4] sm:$0xf] %v314
      %p319 = scmp.lt.s32.totalorder %s18, 3
      %s320 = scalar_select %p319, %s18, 3
      %p321 = scmp.lt.s32.totalorder %s19, 0
      %s322 = scalar_select %p321, %s19, 0
      %s323 = smul.addr %s320, 2
      %s324 = sadd.s32 %s322, %s323
      %s325 = smul.addr %s324, 4
      %s326 = scalar_lea.vmem %s3, %s325
      // Predicated region
      $region33: #{_forward_impl.2} parent=31 // pred_check
        %p327 = pneg %p126
      $region34: #{_forward_impl.2} parent=31 // pred_check_branch
        %329 = sbr.rel (%p327) target = $region36
      $region35: #{_forward_impl.2} parent=31 // pred_region
        _
      $region36: #{_forward_impl.2} parent=31 // pred_fallthru
        _
    $region32: #{_forward_impl.2} parent=5 // pred_fallthru
      _
    %p330 = scmp.le.s32.totalorder 2, %s9
    // Predicated region
    $region37: #{_forward_impl.2} parent=5 // pred_check
      %p331 = pneg %p330
    $region38: #{_forward_impl.2} parent=5 // pred_check_branch
      %333 = sbr.rel (%p331) target = $region40
    $region39: #{_forward_impl.2} parent=5 // pred_region
      %s334 = ssub.s32 %s9, 2
      // Predicated region
      $region41: #{_forward_impl.2} parent=39 // pred_check
        %p335 = pneg %p132
      $region42: #{_forward_impl.2} parent=39 // pred_check_branch
        %337 = sbr.rel (%p335) target = $region44
      $region43: #{_forward_impl.2} parent=39 // pred_region
        %p338 = scmp.lt.s32.totalorder %s20, 3
        %s339 = scalar_select %p338, %s20, 3
        %p340 = scmp.lt.s32.totalorder %s21, 0
        %s341 = scalar_select %p340, %s21, 0
        %s342 = smul.addr %s339, 2
        %s343 = sadd.s32 %s341, %s342
        %s344 = smul.addr %s343, 4
        %s345 = scalar_lea.vmem %s3, %s344
      $region44: #{_forward_impl.2} parent=39 // pred_fallthru
        _
    $region40: #{_forward_impl.2} parent=5 // pred_fallthru
      _
  $region6: #{_forward_impl.2} parent=0 // loop_footer
    %s13 = sadd.s32 1, %s9
  $region7: #{_forward_impl.2} parent=0 // loop_footer_branch
    %8 = sbr.rel target = $region3
  $region8: #{_forward_impl.2} parent=0 // loop_exit
    _

// kernel: _forward_impl.3
$region0: #{_forward_impl.3}
  #allocation0 [shape = 'u32[]', space=smem, size = 0x4, offset = 0x4, fixed_abs, tag = 'smem constant byte address 0x4 - core index']
  #allocation1 [shape = 'u32[144,128]{1,0:T(1,128)}', space=vmem, size = 0x12000, scoped, tag = 'internal scratch']
  %s0 = inlined_call_operand.vmem [shape: bf16[1,8,128], index: 0, kind: input, shape index: {}]
  %s1 = inlined_call_operand.vmem [shape: bf16[1,32,8], index: 1, kind: input, shape index: {}]
  %s2 = inlined_call_operand.vmem [shape: f32[1,32,1], index: 2, kind: input, shape index: {}]
  %s3 = inlined_call_operand.vmem [shape: bf16[1,32,128], index: 3, kind: output, shape index: {}]
  %s4 = sld [smem:[#allocation0]]
  $region22: #{_forward_impl.3} parent=0
    _
  %s6 = ssub.s32 1, %s4
  %s7 = scalar_select 0, %s6, %s4
  // Predicated region
  $region2: #{_forward_impl.3} parent=0 // pred_check
    _
  $region3: #{_forward_impl.3} parent=0 // pred_check_branch
    %9 = sbr.rel (0) target = $region5
  $region4: #{_forward_impl.3} parent=0 // pred_region
    _
  $region5: #{_forward_impl.3} parent=0 // pred_fallthru
    _
  // Predicated region
  $region6: #{_forward_impl.3} parent=0 // pred_check
    _
  $region7: #{_forward_impl.3} parent=0 // pred_check_branch
    %11 = sbr.rel (0) target = $region9
  $region8: #{_forward_impl.3} parent=0 // pred_region
    _
  $region9: #{_forward_impl.3} parent=0 // pred_fallthru
    _
  // Predicated region
  $region10: #{_forward_impl.3} parent=0 // pred_check
    _
  $region11: #{_forward_impl.3} parent=0 // pred_check_branch
    %13 = sbr.rel (0) target = $region13
  $region12: #{_forward_impl.3} parent=0 // pred_region
    _
  $region13: #{_forward_impl.3} parent=0 // pred_fallthru
    _
  %v15 = vld [vmem:[%s1] sm:$0xf]
  %v16 = vld [vmem:[%s1 + $0x4] sm:$0xf]
  %v17 = vld [vmem:[%s1 + $0x8] sm:$0xf]
  %v18 = vld [vmem:[%s1 + $0xc] sm:$0xf]
  %v19 = vld [vmem:[%s0] sm:$0xf]
  %v20 = vld [vmem:[%s2] sm:$0xff]
  %v21 = vld [vmem:[%s2 + $0x8] sm:$0xff]
  %v22 = vld [vmem:[%s2 + $0x10] sm:$0xff]
  %v23 = vld [vmem:[%s2 + $0x18] sm:$0xff]
  %25 = vset.pattern.permute.xlu0 0
  %26 = vperm.xlu0 %25, %v20
  %v27 = vpop.permute.xlu0 %26
  %30 = vset.pattern.permute.xlu0 0
  %31 = vperm.xlu0 %30, %v21
  %v32 = vpop.permute.xlu0 %31
  %35 = vset.pattern.permute.xlu0 0
  %36 = vperm.xlu0 %35, %v22
  %v37 = vpop.permute.xlu0 %36
  %40 = vset.pattern.permute.xlu0 0
  %41 = vperm.xlu0 %40, %v23
  %v42 = vpop.permute.xlu0 %41
  %v48 = vunpack.c.l.b16 %v15
  %v49 = vunpack.c.l.b16 %v16
  %v50 = vunpack.c.l.b16 %v17
  %v51 = vunpack.c.l.b16 %v18
  %v52 = vpack.c.b16 %v49, %v48
  %v53 = vpack.c.b16 %v51, %v50
  %vm54 = vcmask 64512
  %v56 = vsel %vm54, %v52, 0
  %v59 = vsel %vm54, %v53, 0
  %vm61 = vcmask 1043456
  %v63 = vsel %vm61, %v19, 0
  %65 = vmatprep.subr.bf16.mxu0 0
  %66 = vmatpush1.bf16.msra.mxu0 %v63
  %67 = vmatprep.subr.bf16.mxu0 0
  %68 = vmatpush1.bf16.msra.mxu0 0
  %69 = vmatprep.subr.bf16.mxu0 0
  %70 = vmatpush1.bf16.msra.mxu0 0
  %71 = vmatprep.subr.bf16.mxu0 0
  %72 = vmatpush1.bf16.msra.mxu0 0
  %73 = vmatprep.subr.bf16.mxu0 0
  %74 = vmatpush1.bf16.msra.mxu0 0
  %75 = vmatprep.subr.bf16.mxu0 0
  %76 = vmatpush1.bf16.msra.mxu0 0
  %77 = vmatprep.subr.bf16.mxu0 0
  %78 = vmatpush1.bf16.msra.mxu0 0
  %79 = vmatprep.subr.bf16.mxu0 0
  %80 = vmatpush1.bf16.msra.mxu0 0
  %81 = vmatprep.subr.bf16.mxu0 0
  %82 = vmatpush1.bf16.msra.mxu0 0
  %83 = vmatprep.subr.bf16.mxu0 0
  %84 = vmatpush1.bf16.msra.mxu0 0
  %85 = vmatprep.subr.bf16.mxu0 0
  %86 = vmatpush1.bf16.msra.mxu0 0
  %87 = vmatprep.subr.bf16.mxu0 0
  %88 = vmatpush1.bf16.msra.mxu0 0
  %89 = vmatprep.subr.bf16.mxu0 0
  %90 = vmatpush1.bf16.msra.mxu0 0
  %91 = vmatprep.subr.bf16.mxu0 0
  %92 = vmatpush1.bf16.msra.mxu0 0
  %93 = vmatprep.subr.bf16.mxu0 0
  %94 = vmatpush1.bf16.msra.mxu0 0
  %95 = vmatprep.subr.bf16.mxu0 0
  %96 = vmatpush1.bf16.msra.mxu0 0
  %97 = vmatprep.mubr.bf16.mxu0 0
  %98 = vmatmul.mubr.bf16.gmra.mrb[0].mxu0 %v56
  %v99 = vpop.f32.mrb[0].mxu0
  %v100 = vadd.f32 %v27, %v99
  %v101 = vpop.f32.mrb[0].mxu0
  %v102 = vpop.f32.mrb[0].mxu0
  %v103 = vadd.f32 %v32, %v102
  %v104 = vpop.f32.mrb[0].mxu0
  %105 = vmatprep.mubr.bf16.mxu0 0
  %106 = vmatmul.mubr.bf16.gmra.mrb[0].mxu0 %v59
  %v107 = vpop.f32.mrb[0].mxu0
  %v108 = vadd.f32 %v37, %v107
  %v109 = vpop.f32.mrb[0].mxu0
  %v110 = vpop.f32.mrb[0].mxu0
  %v111 = vadd.f32 %v42, %v110
  %v112 = vpop.f32.mrb[0].mxu0
  %113 = vdwg.mxu0
  %v114 = vpack.c.bf16 %v103, %v100
  %v115 = vpack.c.bf16 %v111, %v108
  %v118 = vunpack.c.l.b16 %v114
  %v119 = vunpack.c.h.b16 %v114
  %v120 = vunpack.c.l.b16 %v115
  %v121 = vunpack.c.h.b16 %v115
  %v122 = vpack.c.b16 %v118, %v118
  %v123 = vpack.c.b16 %v119, %v119
  %v124 = vpack.c.b16 %v120, %v120
  %v125 = vpack.c.b16 %v121, %v121
  %130 = vst [vmem:[%s3] sm:$0xf] %v122
  %131 = vst [vmem:[%s3 + $0x4] sm:$0xf] %v123
  %132 = vst [vmem:[%s3 + $0x8] sm:$0xf] %v124
  %133 = vst [vmem:[%s3 + $0xc] sm:$0xf] %v125
  // Predicated region
  $region14: #{_forward_impl.3} parent=0 // pred_check
    _
  $region15: #{_forward_impl.3} parent=0 // pred_check_branch
    %135 = sbr.rel (0) target = $region17
  $region16: #{_forward_impl.3} parent=0 // pred_region
    _
  $region17: #{_forward_impl.3} parent=0 // pred_fallthru
    _
  // Predicated region
  $region18: #{_forward_impl.3} parent=0 // pred_check
    _
  $region19: #{_forward_impl.3} parent=0 // pred_check_branch
    %137 = sbr.rel (0) target = $region21
  $region20: #{_forward_impl.3} parent=0 // pred_region
    _
  $region21: #{_forward_impl.3} parent=0 // pred_fallthru
    _

</llo_original>
